<compile_context>
chip_gen: v6e
topology: v6e:2x2x1
jax: 0.10.0
libtpu: 0.0.40
codegen_flags: <defaults>
</compile_context>

<pallas_src>
import functools

import jax
import jax.numpy as jnp
from jax.experimental import pallas as pl
from jax.experimental.pallas import tpu as pltpu


def _round_up(v, m):
    return -(-v // m) * m


def _cdiv(a, b):
    return -(-a // b)


_VMEM_LIMIT_BYTES = 48 << 20    # raised scoped-VMEM limit; <= 48 MiB keeps v7x (64 MiB phys) safe
_BLOCK_BUDGET_BYTES = 28 << 20  # budget for pipelined x/out blocks (+acc); headroom under 48 MiB


# --------------------------------- kernels ---------------------------------

def _affine_sigmoid_kernel(x_ref, w_ref, b_ref, o_ref):
    # Simple path: full M in one lane-extent block.
    # x_ref: (TB, M) batch tile (pipelined), w_ref: (1, M) f32 (resident),
    # b_ref: (1, 1) f32 (resident), o_ref: (TB, 1) f32.
    x = x_ref[...].astype(jnp.float32)
    w = w_ref[...].astype(jnp.float32)
    # Mat-vec as VPU multiply + XLU lane reduction (MXU would be >99% padding).
    z = jnp.sum(x * w, axis=1, keepdims=True)            # (TB, 1)
    o_ref[...] = jax.nn.sigmoid(z + b_ref[...])


def _affine_sigmoid_mtiled_kernel(x_ref, w_ref, b_ref, o_ref, acc_ref, *,
                                  tm, m_total, need_mask):
    # Fallback for very large M: grid = (batch tiles, M tiles), M innermost
    # ("arbitrary"), f32 accumulator scratch, sigmoid in the finalize branch.
    k = pl.program_id(1)

    @pl.when(k == 0)
    def _():
        acc_ref[...] = jnp.zeros_like(acc_ref)

    x = x_ref[...].astype(jnp.float32)                   # (TB, TM)
    w = w_ref[...].astype(jnp.float32)                   # (1, TM)
    prod = x * w
    if need_mask:
        # Ragged last M tile: zero the out-of-range lanes (boundary reads are
        # padded with unspecified data).
        col = jax.lax.broadcasted_iota(jnp.int32, (1, tm), 1) + k * tm
        prod = jnp.where(col < m_total, prod, 0.0)
    acc_ref[...] += jnp.sum(prod, axis=1, keepdims=True)

    @pl.when(k == pl.num_programs(1) - 1)
    def _():
        o_ref[...] = jax.nn.sigmoid(acc_ref[...] + b_ref[...])


# --------------------------------- wrapper ----------------------------------

def network_forward(x, params, *, force_m_tile=None):
    """x: (B, M). params: torch-convention Linear weights.

    Returns sigmoid(out(layer2(layer1(x)))), shape (B, 1), f32.
    force_m_tile: optional int to force the M-reduction fallback (testing).
    """
    B, M = x.shape
    w1, b1 = params["w1"], params["b1"]   # (5, M), (5,)
    w2, b2 = params["w2"], params["b2"]   # (5, 5), (5,)
    w3, b3 = params["w3"], params["b3"]   # (1, 5), (1,)

    f32 = jnp.float32
    # Collapse the three affine layers (exact up to f32 rounding order):
    #   z = x @ W1.T @ W2.T @ W3.T + ((b1 @ W2.T + b2) @ W3.T + b3)
    w_row = (w3.astype(f32) @ w2.astype(f32)) @ w1.astype(f32)            # (1, M)
    b_eff = (b1.astype(f32) @ w2.T.astype(f32)) @ w3.T.astype(f32) \
        + b2.astype(f32) @ w3.T.astype(f32) + b3.astype(f32)              # (1,)

    w_k = w_row                                   # keep f32; tiny resident block
    b_k = b_eff.reshape(1, 1).astype(f32)         # (1, 1)

    itemsize = jnp.dtype(x.dtype).itemsize
    x_row_bytes = _round_up(M, 128) * itemsize    # lane-padded VMEM footprint of one x row
    out_row_bytes = 128 * 4                       # (TB,1) f32 block lane-pads to 128
    b_rows = _round_up(max(B, 1), 8)

    # Minimum (8-row) tile footprint with double buffering; if even that blows
    # the budget, M must be gridded.
    min_tile_bytes = 8 * 2 * (x_row_bytes + out_row_bytes)
    use_m_tiling = (force_m_tile is not None) or (min_tile_bytes > _BLOCK_BUDGET_BYTES)

    if not use_m_tiling:
        # Per-row VMEM cost: 2 x-buffers + 2 lane-padded out-buffers.
        per_row = 2 * x_row_bytes + 2 * out_row_bytes
        tb_cap = max(8, (_BLOCK_BUDGET_BYTES // per_row) // 8 * 8)
        TB = min(tb_cap, b_rows)
        if B >= 64:
            # Keep >= ~4 grid steps so v7x's two TensorCores both get work.
            TB = min(TB, max(8, _round_up(_cdiv(B, 4), 8)))
        grid_b = _cdiv(B, TB)

        out = pl.pallas_call(
            _affine_sigmoid_kernel,
            out_shape=jax.ShapeDtypeStruct((B, 1), jnp.float32),
            grid=(grid_b,),
            in_specs=[
                pl.BlockSpec((TB, M), lambda i: (i, 0)),   # x: tiled over batch
                pl.BlockSpec((1, M), lambda i: (0, 0)),    # collapsed weights (resident)
                pl.BlockSpec((1, 1), lambda i: (0, 0)),    # collapsed bias (resident)
            ],
            out_specs=pl.BlockSpec((TB, 1), lambda i: (i, 0)),
            compiler_params=pltpu.CompilerParams(
                dimension_semantics=("parallel",),
                vmem_limit_bytes=_VMEM_LIMIT_BYTES),
        )(x, w_k, b_k)
        return out

    # ---- M-reduction fallback (very large M, or forced for testing) ----
    TB = min(512, b_rows)
    if force_m_tile is not None:
        TM = int(force_m_tile)
    else:
        avail = _BLOCK_BUDGET_BYTES - TB * (2 * out_row_bytes + 128 * 4)  # out dbl-buf + acc
        TM = max(128, (avail // (2 * TB * itemsize)) // 128 * 128)
    TM = min(TM, _round_up(M, 128))
    grid_b = _cdiv(B, TB)
    grid_m = _cdiv(M, TM)
    need_mask = (M % TM) != 0

    kernel = functools.partial(
        _affine_sigmoid_mtiled_kernel, tm=TM, m_total=M, need_mask=need_mask)

    out = pl.pallas_call(
        kernel,
        out_shape=jax.ShapeDtypeStruct((B, 1), jnp.float32),
        grid=(grid_b, grid_m),
        in_specs=[
            pl.BlockSpec((TB, TM), lambda i, k: (i, k)),
            pl.BlockSpec((1, TM), lambda i, k: (0, k)),
            pl.BlockSpec((1, 1), lambda i, k: (0, 0)),
        ],
        out_specs=pl.BlockSpec((TB, 1), lambda i, k: (i, 0)),
        scratch_shapes=[pltpu.VMEM((TB, 1), jnp.float32)],
        compiler_params=pltpu.CompilerParams(
            dimension_semantics=("parallel", "arbitrary"),
            vmem_limit_bytes=_VMEM_LIMIT_BYTES),
    )(x, w_k, b_k)
    return out


def _init_params(key, M):
    """Deterministic init mimicking nn.Linear default (uniform +-1/sqrt(fan_in))."""
    ks = jax.random.split(key, 6)

    def lin(kw, kb, fan_in, fan_out):
        bound = 1.0 / jnp.sqrt(jnp.float32(fan_in))
        w = jax.random.uniform(kw, (fan_out, fan_in), jnp.float32, -bound, bound)
        b = jax.random.uniform(kb, (fan_out,), jnp.float32, -bound, bound)
        return w, b

    w1, b1 = lin(ks[0], ks[1], M, 5)
    w2, b2 = lin(ks[2], ks[3], 5, 5)
    w3, b3 = lin(ks[4], ks[5], 5, 1)
    return {"w1": w1, "b1": b1, "w2": w2, "b2": b2, "w3": w3, "b3": b3}


def _ref_forward(x, params):
    # Pure-JAX layered reference of the exact torch-module math.
    h1 = x @ params["w1"].T + params["b1"]
    h2 = h1 @ params["w2"].T + params["b2"]
    return jax.nn.sigmoid(h2 @ params["w3"].T + params["b3"])


if __name__ == "__main__":
    key = jax.random.PRNGKey(0)
    k_x1, k_p1, k_x2, k_p2, k_x3, k_p3 = jax.random.split(key, 6)

    # 1) Tiny case, simple (full-M, single-tile) path.
    B, M = 8, 32
    x = jax.random.normal(k_x1, (B, M), jnp.float32)
    params = _init_params(k_p1, M)
    y = jax.block_until_ready(network_forward(x, params))
    assert y.shape == (B, 1)
    assert jnp.allclose(y, _ref_forward(x, params), atol=1e-5, rtol=1e-5)

    # 2) Simple path with a multi-step batch grid and a ragged last batch tile
    #    (exercises boundary masking without any jnp.pad).
    B2, M2 = 100, 32
    x2 = jax.random.normal(k_x2, (B2, M2), jnp.float32)
    params2 = _init_params(k_p2, M2)
    y2 = jax.block_until_ready(network_forward(x2, params2))
    assert y2.shape == (B2, 1)
    assert jnp.allclose(y2, _ref_forward(x2, params2), atol=1e-5, rtol=1e-5)

    # 3) Forced M-reduction fallback (ragged last M tile + ragged batch tile).
    B3, M3 = 20, 288
    x3 = jax.random.normal(k_x3, (B3, M3), jnp.float32)
    params3 = _init_params(k_p3, M3)
    y3 = jax.block_until_ready(network_forward(x3, params3, force_m_tile=128))
    assert y3.shape == (B3, 1)
    assert jnp.allclose(y3, _ref_forward(x3, params3), atol=1e-5, rtol=1e-5)

    print("KERNEL_OK")
</pallas_src>

<mosaic_0001>
module attributes {stable_mosaic.version = 11 : i64} {
  func.func @_affine_sigmoid_kernel(%arg0: i32, %arg1: memref<8x32xf32, #tpu.memory_space<vmem>>, %arg2: memref<1x32xf32, #tpu.memory_space<vmem>>, %arg3: memref<1x1xf32, #tpu.memory_space<vmem>>, %arg4: memref<8x1xf32, #tpu.memory_space<vmem>>) attributes {dimension_semantics = [#tpu.dimension_semantics<parallel>], iteration_bounds = array<i64: 1>, scalar_prefetch = 0 : i64, scratch_operands = 0 : i64, tpu.core_type = #tpu.core_type<tc>, window_params = [{transform_indices = @transform_0, window_bounds = array<i64: 8, 32>}, {pipeline_mode = #tpu.pipeline_mode<synchronous>, transform_indices = @transform_1, window_bounds = array<i64: 1, 32>}, {pipeline_mode = #tpu.pipeline_mode<synchronous>, transform_indices = @transform_2, window_bounds = array<i64: 1, 1>}, {transform_indices = @transform_3, window_bounds = array<i64: 8, 1>}]} {
    %c0 = arith.constant 0 : index
    %c0_0 = arith.constant 0 : index
    %0 = vector.load %arg1[%c0, %c0_0] : memref<8x32xf32, #tpu.memory_space<vmem>>, vector<8x32xf32>
    %c0_1 = arith.constant 0 : index
    %c0_2 = arith.constant 0 : index
    %1 = vector.load %arg2[%c0_1, %c0_2] : memref<1x32xf32, #tpu.memory_space<vmem>>, vector<1x32xf32>
    %2 = vector.broadcast %1 : vector<1x32xf32> to vector<8x32xf32>
    %3 = arith.mulf %0, %2 : vector<8x32xf32>
    %cst = arith.constant dense<0.000000e+00> : vector<8xf32>
    %4 = vector.multi_reduction <add>, %3, %cst [1] : vector<8x32xf32> to vector<8xf32>
    %5 = vector.shape_cast %4 : vector<8xf32> to vector<8x1xf32>
    %c0_3 = arith.constant 0 : index
    %c0_4 = arith.constant 0 : index
    %6 = vector.load %arg3[%c0_3, %c0_4] : memref<1x1xf32, #tpu.memory_space<vmem>>, vector<1x1xf32>
    %7 = vector.broadcast %6 : vector<1x1xf32> to vector<8x1xf32>
    %8 = arith.addf %5, %7 : vector<8x1xf32>
    %9 = arith.negf %8 : vector<8x1xf32>
    %10 = math.exp %9 : vector<8x1xf32>
    %cst_5 = arith.constant 1.000000e+00 : f32
    %11 = vector.broadcast %cst_5 : f32 to vector<8x1xf32>
    %12 = arith.addf %11, %10 : vector<8x1xf32>
    %13 = arith.divf %11, %12 : vector<8x1xf32>
    %c0_6 = arith.constant 0 : index
    %c0_7 = arith.constant 0 : index
    %14 = vector.load %arg4[%c0_6, %c0_7] : memref<8x1xf32, #tpu.memory_space<vmem>>, vector<8x1xf32>
    tpu.vector_store %arg4[%c0_6, %c0_7], %13 {strides = array<i32>} : memref<8x1xf32, #tpu.memory_space<vmem>>, vector<8x1xf32>,
    return
  }
  func.func @transform_0(%arg0: i32) -> (i32, i32) {
    %c0_i32 = arith.constant 0 : i32
    %c0_i32_0 = arith.constant 0 : i32
    return %arg0, %c0_i32 : i32, i32
  }
  func.func @transform_1(%arg0: i32) -> (i32, i32) {
    %c0_i32 = arith.constant 0 : i32
    %c0_i32_0 = arith.constant 0 : i32
    %c0_i32_1 = arith.constant 0 : i32
    return %c0_i32, %c0_i32_0 : i32, i32
  }
  func.func @transform_2(%arg0: i32) -> (i32, i32) {
    %c0_i32 = arith.constant 0 : i32
    %c0_i32_0 = arith.constant 0 : i32
    %c0_i32_1 = arith.constant 0 : i32
    return %c0_i32, %c0_i32_0 : i32, i32
  }
  func.func @transform_3(%arg0: i32) -> (i32, i32) {
    %c0_i32 = arith.constant 0 : i32
    %c0_i32_0 = arith.constant 0 : i32
    return %arg0, %c0_i32 : i32, i32
  }
}

</mosaic_0001>

<llo_original>
// kernel: tpu_custom_call.1
$region0: #{tpu_custom_call.1}
  #allocation0 [shape = 'u32[]', space=smem, size = 0x4, offset = 0x4, fixed_abs, tag = 'smem constant byte address 0x4 - core index']
  #allocation1 [shape = 'u32[144,128]{1,0:T(1,128)}', space=vmem, size = 0x12000, scoped, tag = 'internal scratch']
  #allocation2 [shape = 'f32[1,1]{1,0:T(1,128)S(1)}', space=vmem, size = 0x200, scoped, tag = 'scoped memory for tpu_custom_call.1']
  %s0 = inlined_call_operand.hbm [shape: f32[8,32], index: 0, kind: input, shape index: {}]
  %s1 = inlined_call_operand.vmem [shape: f32[1,32], index: 1, kind: input, shape index: {}]
  %s2 = inlined_call_operand.<no memory space> [shape: f32[1,1], index: 2, kind: input, shape index: {}]
  %s3 = inlined_call_operand.vmem [shape: f32[8,1], index: 3, kind: output, shape index: {}]
  %s4 = sld [smem:[#allocation0]]
  $region26: #{tpu_custom_call.1} parent=0
    _
  %s6 = ssub.s32 1, %s4
  %s7 = scalar_select 0, %s6, %s4
  %v8 = vstv %s2
  %9 = vst [vmem:[#allocation2] sm:$0x1] %v8
  $region1: #{tpu_custom_call.1} parent=0
    #allocation3 [shape = 'u8[4096]{0}', space=vmem, size = 0x1000, scoped, tag = 'input window, operand 0, single buffered']
    #allocation4 [shape = 's32[1]{0}', space=sflag, size = 0x4, scoped, tag = 'scoped memory for tpu_custom_call.1']
    %10 = vsyncpa [#allocation4], 0
    // Predicated region
    $region2: #{tpu_custom_call.1} parent=1 // pred_check
      _
    $region3: #{tpu_custom_call.1} parent=1 // pred_check_branch
      %12 = sbr.rel (0) target = $region5
    $region4: #{tpu_custom_call.1} parent=1 // pred_region
      %s14 = ssub.s32 128, 128
      %15 = vsyncadd [#allocation4], %s14
      %s17 = sshll.u32 [#allocation3], 4
      %s18 = int_to_ptr.vmem [resolvable:$true] %s17
      %20 = dma.hbm_to_vmem [thread:$0]  %s0, 128, %s18, [#allocation4]
    $region5: #{tpu_custom_call.1} parent=1 // pred_fallthru
      _
    // Predicated region
    $region6: #{tpu_custom_call.1} parent=1 // pred_check
      _
    $region7: #{tpu_custom_call.1} parent=1 // pred_check_branch
      %22 = sbr.rel (0) target = $region9
    $region8: #{tpu_custom_call.1} parent=1 // pred_region
      _
    $region9: #{tpu_custom_call.1} parent=1 // pred_fallthru
      _
    // Predicated region
    $region10: #{tpu_custom_call.1} parent=1 // pred_check
      _
    $region11: #{tpu_custom_call.1} parent=1 // pred_check_branch
      %24 = sbr.rel (0) target = $region13
    $region12: #{tpu_custom_call.1} parent=1 // pred_region
      _
    $region13: #{tpu_custom_call.1} parent=1 // pred_fallthru
      _
    // Predicated region
    $region14: #{tpu_custom_call.1} parent=1 // pred_check
      _
    $region15: #{tpu_custom_call.1} parent=1 // pred_check_branch
      %26 = sbr.rel (0) target = $region17
    $region16: #{tpu_custom_call.1} parent=1 // pred_region
      %27 = dma.done [#allocation4], 128
    $region17: #{tpu_custom_call.1} parent=1 // pred_fallthru
      _
    %v28 = vld [vmem:[#allocation3] sm:$0xff]
    %v29 = vld [vmem:[%s1] sm:$0x1]
    %v31 = vlaneseq
    %v32 = vshrl.u32 %v31, 7
    %v33 = vsub.s32 0, %v32
    %v34 = vrot.slane %v29, %v33
    %v36 = vmul.f32 %v28, %v34
    %vm37 = vcmask 261120
    %v38 = vsel %vm37, %v36, 0.0
    %39 = vadd.xlane.f32.xlu0 %v38
    %v40 = vpop.xlane.xlu0 %39
    %v41 = vld [vmem:[#allocation2] sm:$0x1]
    %v43 = vlaneseq
    %v44 = vshrl.u32 %v43, 7
    %v45 = vsub.s32 0, %v44
    %v46 = vrot.slane %v41, %v45
    %v48 = vadd.f32 %v40, %v46
    %v49 = vxor.u32 %v48, 2147483648
    %v50 = vmul.f32 %v49, 1.442695
    %v51 = vpow.pop %v50
    %v52 = vadd.f32 %v51, 1.0
    %v53 = vrcp.pop %v52
    %v54 = vmul.f32 1.0, %v53
    %vm55 = vcmask 7168
    %56 = vst.msk [vmem:[%s3] sm:$0xff] %vm55, %v54
    // Predicated region
    $region18: #{tpu_custom_call.1} parent=1 // pred_check
      _
    $region19: #{tpu_custom_call.1} parent=1 // pred_check_branch
      %58 = sbr.rel (0) target = $region21
    $region20: #{tpu_custom_call.1} parent=1 // pred_region
      _
    $region21: #{tpu_custom_call.1} parent=1 // pred_fallthru
      _
    // Predicated region
    $region22: #{tpu_custom_call.1} parent=1 // pred_check
      _
    $region23: #{tpu_custom_call.1} parent=1 // pred_check_branch
      %60 = sbr.rel (0) target = $region25
    $region24: #{tpu_custom_call.1} parent=1 // pred_region
      _
    $region25: #{tpu_custom_call.1} parent=1 // pred_fallthru
      _
    %61 = vsyncpa [#allocation4], 1

</llo_original>
